<compile_context>
chip_gen: v6e
topology: v6e:2x2x1
jax: 0.10.0
libtpu: 0.0.40
codegen_flags: <defaults>
</compile_context>

<pallas_src>
import jax
import jax.numpy as jnp
from jax.experimental import pallas as pl
from jax.experimental.pallas import tpu as pltpu


def self_attention_kernel(values_ref, w1_ref, b1_ref, new_ftr_ref, weights_ref):
    v = values_ref[...]            # (TB, S, D) f32 in VMEM
    w1_row = w1_ref[...]           # (1, D)   (torch Linear weight layout)
    b1 = b1_ref[0]                 # scalar bias from SMEM

    # Projection on the VPU + XLU lane reduce (N=1 matmul would waste the MXU).
    # z[b, s] = sum_d v[b, s, d] * w1[0, d] + b1
    z = jnp.sum(v * w1_row, axis=-1) + b1            # (TB, S), S on lanes

    # Numerically stable softmax over the sequence axis (lane reduce).
    m = jnp.max(z, axis=-1, keepdims=True)           # (TB, 1)
    e = jnp.exp(z - m)                               # (TB, S)
    denom = jnp.sum(e, axis=-1, keepdims=True)       # (TB, 1)
    inv = pl.reciprocal(denom, approx=True)          # EUP; one per batch row
    weights = e * inv                                # (TB, S)

    # Lane-dense store of the attention weights.
    weights_ref[...] = weights.astype(weights_ref.dtype)

    # Weighted sum over S on the VPU: (TB, S) x (TB, S, D) -> (TB, D).
    new_ftr = jnp.sum(weights[:, :, None] * v, axis=1)
    new_ftr_ref[...] = new_ftr.astype(new_ftr_ref.dtype)


def _pick_batch_tile(B, S, D, itemsize=4, vmem_budget_bytes=24 * 1024 * 1024):
    """Largest batch tile whose double-buffered values tile (+ outputs) fits VMEM."""
    bytes_per_row = 2 * S * D * itemsize + 2 * (S + D) * itemsize
    tb = max(1, vmem_budget_bytes // max(1, bytes_per_row))
    if tb >= B:
        return B
    # Keep the second-minor dim of the 2-D output blocks (8,128)-friendly.
    tb = max(8, (tb // 8) * 8)
    return min(tb, B)


def self_attention(values, w1, b1, *, batch_tile=None):
    """values: (B, S, D) f32; w1: (1, D); b1: (1,). Returns (new_ftr, weights)."""
    B, S, D = values.shape
    tb = batch_tile if batch_tile is not None else _pick_batch_tile(
        B, S, D, values.dtype.itemsize)
    grid = (pl.cdiv(B, tb),)

    out_shapes = (
        jax.ShapeDtypeStruct((B, D), values.dtype),   # new_ftr
        jax.ShapeDtypeStruct((B, S), values.dtype),   # weights (lane-dense)
    )

    new_ftr, weights_2d = pl.pallas_call(
        self_attention_kernel,
        out_shape=out_shapes,
        grid=grid,
        in_specs=[
            pl.BlockSpec((tb, S, D), lambda i: (i, 0, 0)),
            pl.BlockSpec((1, D), lambda i: (0, 0)),
            pl.BlockSpec(memory_space=pltpu.MemorySpace.SMEM),   # bias scalar
        ],
        out_specs=(
            pl.BlockSpec((tb, D), lambda i: (i, 0)),
            pl.BlockSpec((tb, S), lambda i: (i, 0)),
        ),
        compiler_params=pltpu.CompilerParams(
            dimension_semantics=("parallel",),   # v7x: 2 TCs split batch tiles
        ),
    )(values, w1, b1)

    # Match the PyTorch output layout: weights is (B, S, 1).
    return new_ftr, weights_2d[:, :, None]


def self_attention_ref(values, w1, b1):
    """Plain-JAX reference mirroring the PyTorch forward."""
    z = jnp.einsum("bsd,od->bso", values, w1) + b1          # (B, S, 1)
    weights = jax.nn.softmax(z, axis=1)
    new_ftr = jnp.sum(weights * values, axis=1)
    return new_ftr, weights


if __name__ == "__main__":
    # Small, forward-consistent shapes: batch=2, seq=8, glove_dim=32.
    B, S, D = 2, 8, 32
    key = jax.random.PRNGKey(0)
    k_vals, k_w1, k_b1, k_w2, k_b2, k_w3, k_b3 = jax.random.split(key, 7)

    values = jax.random.normal(k_vals, (B, S, D), dtype=jnp.float32)

    # Deterministic parameter init (shapes match nn.Linear in the module).
    w1 = jax.random.normal(k_w1, (1, D), dtype=jnp.float32) * 0.1   # W_1.weight
    b1 = jax.random.normal(k_b1, (1,), dtype=jnp.float32) * 0.1     # W_1.bias
    # W_2, W_3, tanh are defined in __init__ but never used in forward();
    # initialized here for parity, unused in the kernel.
    w2 = jax.random.normal(k_w2, (D, D), dtype=jnp.float32) * 0.1
    b2 = jax.random.normal(k_b2, (D,), dtype=jnp.float32) * 0.1
    w3 = jax.random.normal(k_w3, (1, D), dtype=jnp.float32) * 0.1
    b3 = jax.random.normal(k_b3, (1,), dtype=jnp.float32) * 0.1

    new_ftr, weights = self_attention(values, w1, b1)
    jax.block_until_ready((new_ftr, weights))

    ref_new_ftr, ref_weights = self_attention_ref(values, w1, b1)
    assert new_ftr.shape == (B, D)
    assert weights.shape == (B, S, 1)
    # Tolerance accounts for the approximate EUP reciprocal in the softmax denom.
    assert jnp.allclose(new_ftr, ref_new_ftr, atol=2e-3, rtol=2e-3)
    assert jnp.allclose(weights, ref_weights, atol=2e-3, rtol=2e-3)

    print("KERNEL_OK")
</pallas_src>

<mosaic_0001>
module attributes {stable_mosaic.version = 11 : i64} {
  func.func @self_attention_kernel(%arg0: i32, %arg1: memref<2x8x32xf32, #tpu.memory_space<vmem>>, %arg2: memref<1x32xf32, #tpu.memory_space<vmem>>, %arg3: memref<1xf32, #tpu.memory_space<smem>>, %arg4: memref<2x32xf32, #tpu.memory_space<vmem>>, %arg5: memref<2x8xf32, #tpu.memory_space<vmem>>) attributes {dimension_semantics = [#tpu.dimension_semantics<parallel>], iteration_bounds = array<i64: 1>, scalar_prefetch = 0 : i64, scratch_operands = 0 : i64, tpu.core_type = #tpu.core_type<tc>, window_params = [{transform_indices = @transform_0, window_bounds = array<i64: 2, 8, 32>}, {pipeline_mode = #tpu.pipeline_mode<synchronous>, transform_indices = @transform_1, window_bounds = array<i64: 1, 32>}, {transform_indices = @transform_2, window_bounds = array<i64: 1>}, {transform_indices = @transform_3, window_bounds = array<i64: 2, 32>}, {transform_indices = @transform_4, window_bounds = array<i64: 2, 8>}]} {
    %c0 = arith.constant 0 : index
    %c0_0 = arith.constant 0 : index
    %c0_1 = arith.constant 0 : index
    %0 = vector.load %arg1[%c0, %c0_0, %c0_1] : memref<2x8x32xf32, #tpu.memory_space<vmem>>, vector<2x8x32xf32>
    %c0_2 = arith.constant 0 : index
    %c0_3 = arith.constant 0 : index
    %1 = vector.load %arg2[%c0_2, %c0_3] : memref<1x32xf32, #tpu.memory_space<vmem>>, vector<1x32xf32>
    %c0_4 = arith.constant 0 : index
    %2 = memref.load %arg3[%c0_4] : memref<1xf32, #tpu.memory_space<smem>>
    %3 = vector.shape_cast %1 : vector<1x32xf32> to vector<1x1x32xf32>
    %4 = vector.broadcast %3 : vector<1x1x32xf32> to vector<2x8x32xf32>
    %5 = arith.mulf %0, %4 : vector<2x8x32xf32>
    %cst = arith.constant dense<0.000000e+00> : vector<2x8xf32>
    %6 = vector.multi_reduction <add>, %5, %cst [2] : vector<2x8x32xf32> to vector<2x8xf32>
    %7 = vector.broadcast %2 : f32 to vector<2x8xf32>
    %8 = arith.addf %6, %7 : vector<2x8xf32>
    %cst_5 = arith.constant dense<0xFF800000> : vector<2xf32>
    %9 = vector.multi_reduction <maximumf>, %8, %cst_5 [1] : vector<2x8xf32> to vector<2xf32>
    %10 = vector.shape_cast %9 : vector<2xf32> to vector<2x1xf32>
    %11 = vector.broadcast %10 : vector<2x1xf32> to vector<2x8xf32>
    %12 = arith.subf %8, %11 : vector<2x8xf32>
    %13 = math.exp %12 : vector<2x8xf32>
    %cst_6 = arith.constant dense<0.000000e+00> : vector<2xf32>
    %14 = vector.multi_reduction <add>, %13, %cst_6 [1] : vector<2x8xf32> to vector<2xf32>
    %15 = vector.shape_cast %14 : vector<2xf32> to vector<2x1xf32>
    %16 = tpu.reciprocal %15 {approx = true} : vector<2x1xf32> -> vector<2x1xf32>
    %17 = vector.broadcast %16 : vector<2x1xf32> to vector<2x8xf32>
    %18 = arith.mulf %13, %17 : vector<2x8xf32>
    %c0_7 = arith.constant 0 : index
    %c0_8 = arith.constant 0 : index
    %19 = vector.load %arg5[%c0_7, %c0_8] : memref<2x8xf32, #tpu.memory_space<vmem>>, vector<2x8xf32>
    tpu.vector_store %arg5[%c0_7, %c0_8], %18 {strides = array<i32>} : memref<2x8xf32, #tpu.memory_space<vmem>>, vector<2x8xf32>,
    %20 = vector.shape_cast %18 : vector<2x8xf32> to vector<2x8x1xf32>
    %21 = vector.broadcast %20 : vector<2x8x1xf32> to vector<2x8x32xf32>
    %22 = arith.mulf %21, %0 : vector<2x8x32xf32>
    %cst_9 = arith.constant dense<0.000000e+00> : vector<2x32xf32>
    %23 = vector.multi_reduction <add>, %22, %cst_9 [1] : vector<2x8x32xf32> to vector<2x32xf32>
    %c0_10 = arith.constant 0 : index
    %c0_11 = arith.constant 0 : index
    %24 = vector.load %arg4[%c0_10, %c0_11] : memref<2x32xf32, #tpu.memory_space<vmem>>, vector<2x32xf32>
    tpu.vector_store %arg4[%c0_10, %c0_11], %23 {strides = array<i32>} : memref<2x32xf32, #tpu.memory_space<vmem>>, vector<2x32xf32>,
    return
  }
  func.func @transform_0(%arg0: i32) -> (i32, i32, i32) {
    %c0_i32 = arith.constant 0 : i32
    %c0_i32_0 = arith.constant 0 : i32
    %c0_i32_1 = arith.constant 0 : i32
    return %arg0, %c0_i32, %c0_i32_0 : i32, i32, i32
  }
  func.func @transform_1(%arg0: i32) -> (i32, i32) {
    %c0_i32 = arith.constant 0 : i32
    %c0_i32_0 = arith.constant 0 : i32
    %c0_i32_1 = arith.constant 0 : i32
    return %c0_i32, %c0_i32_0 : i32, i32
  }
  func.func @transform_2(%arg0: i32) -> i32 {
    %c0_i32 = arith.constant 0 : i32
    %c0_i32_0 = arith.constant 0 : i32
    return %c0_i32 : i32
  }
  func.func @transform_3(%arg0: i32) -> (i32, i32) {
    %c0_i32 = arith.constant 0 : i32
    %c0_i32_0 = arith.constant 0 : i32
    return %arg0, %c0_i32 : i32, i32
  }
  func.func @transform_4(%arg0: i32) -> (i32, i32) {
    %c0_i32 = arith.constant 0 : i32
    %c0_i32_0 = arith.constant 0 : i32
    return %arg0, %c0_i32 : i32, i32
  }
}

</mosaic_0001>

<llo_original>
// kernel: tpu_custom_call.1
$region0: #{tpu_custom_call.1}
  #allocation0 [shape = 'u32[]', space=smem, size = 0x4, offset = 0x4, fixed_abs, tag = 'smem constant byte address 0x4 - core index']
  #allocation1 [shape = 'u32[144,128]{1,0:T(1,128)}', space=vmem, size = 0x12000, scoped, tag = 'internal scratch']
  #allocation2 [shape = 'f32[1]{0:T(128)S(6)}', space=smem, size = 0x200, scoped, tag = 'scoped memory for tpu_custom_call.1']
  %s0 = inlined_call_operand.hbm [shape: f32[2,8,32], index: 0, kind: input, shape index: {}]
  %s1 = inlined_call_operand.vmem [shape: f32[1,32], index: 1, kind: input, shape index: {}]
  %s2 = inlined_call_operand.<no memory space> [shape: f32[1], index: 2, kind: input, shape index: {}]
  %s3 = inlined_call_operand.hbm [shape: f32[2,32], index: 3, kind: output, shape index: {0}]
  %s4 = inlined_call_operand.hbm [shape: f32[2,8], index: 4, kind: output, shape index: {1}]
  %5 = xla_tuple %s3, %s4
  %s6 = sld [smem:[#allocation0]]
  $region34: #{tpu_custom_call.1} parent=0
    _
  %s8 = ssub.s32 1, %s6
  %s9 = scalar_select 0, %s8, %s6
  %10 = sst [smem:[#allocation2]] %s2
  $region1: #{tpu_custom_call.1} parent=0
    #allocation3 [shape = 'u8[8192]{0}', space=vmem, size = 0x2000, scoped, tag = 'input window, operand 0, single buffered']
    #allocation4 [shape = 's32[1]{0}', space=sflag, size = 0x4, scoped, tag = 'scoped memory for tpu_custom_call.1']
    #allocation5 [shape = 's32[1]{0}', space=sflag, size = 0x4, scoped, tag = 'scoped memory for tpu_custom_call.1']
    #allocation6 [shape = 'u8[1024]{0}', space=vmem, size = 0x400, scoped, tag = 'output window, operand 0, single buffered']
    #allocation7 [shape = 'u8[1024]{0}', space=vmem, size = 0x400, scoped, tag = 'output window, operand 1, single buffered']
    #allocation8 [shape = 's32[1]{0}', space=sflag, size = 0x4, scoped, tag = 'scoped memory for tpu_custom_call.1']
    %11 = vsyncpa [#allocation4], 0
    %12 = vsyncpa [#allocation5], 0
    %13 = vsyncpa [#allocation8], 0
    // Predicated region
    $region2: #{tpu_custom_call.1} parent=1 // pred_check
      _
    $region3: #{tpu_custom_call.1} parent=1 // pred_check_branch
      %15 = sbr.rel (0) target = $region5
    $region4: #{tpu_custom_call.1} parent=1 // pred_region
      %s17 = ssub.s32 256, 256
      %18 = vsyncadd [#allocation4], %s17
      %s19 = sshll.u32 [#allocation3], 4
      %s20 = int_to_ptr.vmem [resolvable:$true] %s19
      %25 = dma.hbm_to_vmem [thread:$0]  %s0, 256, %s20, [#allocation4], 128, 128, 8
    $region5: #{tpu_custom_call.1} parent=1 // pred_fallthru
      _
    // Predicated region
    $region6: #{tpu_custom_call.1} parent=1 // pred_check
      _
    $region7: #{tpu_custom_call.1} parent=1 // pred_check_branch
      %27 = sbr.rel (0) target = $region9
    $region8: #{tpu_custom_call.1} parent=1 // pred_region
      _
    $region9: #{tpu_custom_call.1} parent=1 // pred_fallthru
      _
    // Predicated region
    $region10: #{tpu_custom_call.1} parent=1 // pred_check
      _
    $region11: #{tpu_custom_call.1} parent=1 // pred_check_branch
      %29 = sbr.rel (0) target = $region13
    $region12: #{tpu_custom_call.1} parent=1 // pred_region
      _
    $region13: #{tpu_custom_call.1} parent=1 // pred_fallthru
      _
    // Predicated region
    $region14: #{tpu_custom_call.1} parent=1 // pred_check
      _
    $region15: #{tpu_custom_call.1} parent=1 // pred_check_branch
      %31 = sbr.rel (0) target = $region17
    $region16: #{tpu_custom_call.1} parent=1 // pred_region
      %32 = dma.done [#allocation4], 256
    $region17: #{tpu_custom_call.1} parent=1 // pred_fallthru
      _
    %v33 = vld [vmem:[#allocation3] sm:$0xff]
    %v34 = vld [vmem:[#allocation3 + $0x8] sm:$0xff]
    %v35 = vld [vmem:[%s1] sm:$0x1]
    %s36 = sld [smem:[#allocation2]]
    %v38 = vlaneseq
    %v39 = vshrl.u32 %v38, 7
    %v40 = vsub.s32 0, %v39
    %v41 = vrot.slane %v35, %v40
    %v43 = vmul.f32 %v33, %v41
    %v44 = vmul.f32 %v34, %v41
    %vm45 = vcmask 261120
    %v46 = vsel %vm45, %v43, 0.0
    %47 = vadd.xlane.f32.xlu0 %v46
    %v48 = vpop.xlane.xlu0 %47
    %v49 = vsel %vm45, %v44, 0.0
    %50 = vadd.xlane.f32.xlu0 %v49
    %v51 = vpop.xlane.xlu0 %50
    %v52 = vstv %s36
    %v53 = vadd.f32 %v48, %v52
    %v54 = vadd.f32 %v51, %v52
    %v57 = vlaneseq
    %v58 = vand.u32 %v57, 127
    %v59 = vlaneseq
    %v60 = vshrl.u32 %v59, 7
    %v61 = vsub.s32 %v58, %v60
    %v62 = vrot.slane %v53, %v61
    %v63 = vlaneseq
    %v64 = vshrl.u32 %v63, 7
    %v65 = vsub.s32 %v58, %v64
    %v66 = vrot.slane %v54, %v65
    %vm67 = vcmask 1041409
    %v68 = vsel %vm67, %v66, %v62
    %vm70 = vcmask 58368
    %v71 = vsel %vm70, %v68, -inf
    %72 = vmax.xlane.f32.xlu0 %v71
    %v73 = vpop.xlane.xlu0 %72
    %v75 = vlaneseq
    %v76 = vshrl.u32 %v75, 7
    %v77 = vsub.s32 0, %v76
    %v78 = vrot.slane %v73, %v77
    %v79 = vlaneseq
    %v80 = vshrl.u32 %v79, 7
    %v81 = vsub.s32 1, %v80
    %v82 = vrot.slane %v73, %v81
    %v85 = vsub.f32 %v53, %v78
    %v86 = vsub.f32 %v54, %v82
    %v87 = vmul.f32 %v85, 1.442695
    %v88 = vpow.pop %v87
    %v89 = vmul.f32 %v86, 1.442695
    %v90 = vpow.pop %v89
    %93 = vset.pattern.permute.xlu0 0
    %94 = vperm.xlu0 %93, %v88
    %v95 = vpop.permute.xlu0 %94
    %96 = vset.pattern.permute.xlu0 0
    %97 = vperm.xlu0 %96, %v90
    %v98 = vpop.permute.xlu0 %97
    %v99 = vlaneseq
    %v100 = vshrl.u32 %v99, 7
    %v101 = vsub.s32 %v58, %v100
    %v102 = vrot.slane %v95, %v101
    %v103 = vlaneseq
    %v104 = vshrl.u32 %v103, 7
    %v105 = vsub.s32 %v58, %v104
    %v106 = vrot.slane %v98, %v105
    %v107 = vsel %vm67, %v106, %v102
    %v109 = vsel %vm70, %v107, 0.0
    %110 = vadd.xlane.f32.xlu0 %v109
    %v111 = vpop.xlane.xlu0 %110
    %v112 = vrcp.pop %v111
    %v114 = vlaneseq
    %v115 = vshrl.u32 %v114, 7
    %v116 = vsub.s32 0, %v115
    %v117 = vrot.slane %v112, %v116
    %v118 = vlaneseq
    %v119 = vshrl.u32 %v118, 7
    %v120 = vsub.s32 1, %v119
    %v121 = vrot.slane %v112, %v120
    %v124 = vmul.f32 %v88, %v117
    %v125 = vmul.f32 %v90, %v121
    %128 = vset.pattern.permute.xlu0 0
    %129 = vperm.xlu0 %128, %v124
    %v130 = vpop.permute.xlu0 %129
    %131 = vset.pattern.permute.xlu0 0
    %132 = vperm.xlu0 %131, %v125
    %v133 = vpop.permute.xlu0 %132
    %v134 = vlaneseq
    %v135 = vshrl.u32 %v134, 7
    %v136 = vsub.s32 %v58, %v135
    %v137 = vrot.slane %v130, %v136
    %v138 = vlaneseq
    %v139 = vshrl.u32 %v138, 7
    %v140 = vsub.s32 %v58, %v139
    %v141 = vrot.slane %v133, %v140
    %v142 = vsel %vm67, %v141, %v137
    %144 = vst.msk [vmem:[#allocation7] sm:$0x3] %vm70, %v142
    %v147 = vmul.f32 %v130, %v33
    %v148 = vmul.f32 %v133, %v34
    %v149 = vsel %vm45, %v147, 0.0
    %v150 = vrot.slane %v149, 4
    %v151 = vadd.f32 %v149, %v150
    %v152 = vrot.slane %v151, 2
    %v153 = vadd.f32 %v151, %v152
    %v154 = vrot.slane %v153, 1
    %v155 = vadd.f32 %v153, %v154
    %v156 = vsel %vm45, %v148, 0.0
    %v157 = vrot.slane %v156, 4
    %v158 = vadd.f32 %v156, %v157
    %v159 = vrot.slane %v158, 2
    %v160 = vadd.f32 %v158, %v159
    %v161 = vrot.slane %v160, 1
    %v162 = vadd.f32 %v160, %v161
    %v165 = vsel %vm67, %v162, %v155
    %vm167 = vcmask 254976
    %168 = vst.msk [vmem:[#allocation6] sm:$0x3] %vm167, %v165
    // Predicated region
    $region18: #{tpu_custom_call.1} parent=1 // pred_check
      _
    $region19: #{tpu_custom_call.1} parent=1 // pred_check_branch
      %170 = sbr.rel (0) target = $region21
    $region20: #{tpu_custom_call.1} parent=1 // pred_region
      %s172 = ssub.s32 32, 32
      %173 = vsyncadd [#allocation5], %s172
      %s175 = sshll.u32 [#allocation6], 4
      %s176 = int_to_ptr.vmem [resolvable:$true] %s175
      %178 = dma.vmem_to_hbm [thread:$0]  %s176, 32, %s3, [#allocation5]
    $region21: #{tpu_custom_call.1} parent=1 // pred_fallthru
      _
    // Predicated region
    $region22: #{tpu_custom_call.1} parent=1 // pred_check
      _
    $region23: #{tpu_custom_call.1} parent=1 // pred_check_branch
      %180 = sbr.rel (0) target = $region25
    $region24: #{tpu_custom_call.1} parent=1 // pred_region
      %s182 = ssub.s32 32, 32
      %183 = vsyncadd [#allocation8], %s182
      %s185 = sshll.u32 [#allocation7], 4
      %s186 = int_to_ptr.vmem [resolvable:$true] %s185
      %188 = dma.vmem_to_hbm [thread:$0]  %s186, 32, %s4, [#allocation8]
    $region25: #{tpu_custom_call.1} parent=1 // pred_fallthru
      _
    // Predicated region
    $region26: #{tpu_custom_call.1} parent=1 // pred_check
      _
    $region27: #{tpu_custom_call.1} parent=1 // pred_check_branch
      %190 = sbr.rel (0) target = $region29
    $region28: #{tpu_custom_call.1} parent=1 // pred_region
      %191 = dma.done [#allocation5], 32
    $region29: #{tpu_custom_call.1} parent=1 // pred_fallthru
      _
    // Predicated region
    $region30: #{tpu_custom_call.1} parent=1 // pred_check
      _
    $region31: #{tpu_custom_call.1} parent=1 // pred_check_branch
      %193 = sbr.rel (0) target = $region33
    $region32: #{tpu_custom_call.1} parent=1 // pred_region
      %194 = dma.done [#allocation8], 32
    $region33: #{tpu_custom_call.1} parent=1 // pred_fallthru
      _
    %195 = vsyncpa [#allocation4], 1
    %196 = vsyncpa [#allocation5], 1
    %197 = vsyncpa [#allocation8], 1

</llo_original>
